<compile_context>
chip_gen: v6e
topology: v6e:2x2x1
jax: 0.10.0
libtpu: 0.0.40
codegen_flags: <defaults>
</compile_context>

<pallas_src>
import functools
import math

import jax
import jax.numpy as jnp
from jax import lax
from jax.experimental import pallas as pl
from jax.experimental.pallas import tpu as pltpu


def _vq_kernel(x_ref, w_ref, b_ref, ew_ref, ec_ref, et_ref, *out_refs,
               n_valid, needs_mask, emit_codes):
    # x_ref:  (Cin, TN)  raw inputs, positions on lanes
    # w_ref:  (D, Cin)   projection weight
    # b_ref:  (D, 1)     projection bias
    # ew_ref: (K, Cin)   embed @ W          (precomputed)
    # ec_ref: (K, 1)     ||e||^2 - 2 e . b  (precomputed)
    # et_ref: (D, K)     embed.T            (precomputed)
    if emit_codes:
        zq_ref, codes_ref, counts_ref, sse_ref = out_refs
    else:
        zq_ref, counts_ref, sse_ref = out_refs

    x = x_ref[...].astype(jnp.float32)                                   # (Cin, TN)
    w = w_ref[...]
    b = b_ref[...]
    ew = ew_ref[...]
    ec = ec_ref[...]
    et = et_ref[...]

    num_embed = ew.shape[0]
    tn = x.shape[1]

    # projection (1x1 conv == per-position linear), needed for z_q/SSE path
    xp = jnp.dot(w, x, preferred_element_type=jnp.float32) + b           # (D, TN)
    # fused embed-dot: E @ (W x + b) = (E W) x + E b  (bias folded into ec)
    ex = jnp.dot(ew, x, preferred_element_type=jnp.float32)              # (K, TN)

    x2 = jnp.sum(xp * xp, axis=0, keepdims=True)                         # (1, TN)
    d2 = x2 + ec - 2.0 * ex                                              # (K, TN)

    # argmin over the codebook axis, first-min tie-break (torch.argmin)
    dmin = jnp.min(d2, axis=0, keepdims=True)                            # (1, TN)
    row = lax.broadcasted_iota(jnp.int32, d2.shape, 0)                   # (K, TN)
    idx = jnp.min(jnp.where(d2 == dmin, row, num_embed),
                  axis=0, keepdims=True)                                 # (1, TN) i32

    # one-hot assignments (VMEM only) and codebook gather via MXU
    r = (row == idx).astype(jnp.float32)                                 # (K, TN)
    if needs_mask:
        col = pl.program_id(0) * tn + lax.broadcasted_iota(
            jnp.int32, (1, tn), 1)
        valid = (col < n_valid).astype(jnp.float32)                      # (1, TN)
        r = r * valid

    zq = jnp.dot(et, r, preferred_element_type=jnp.float32)              # (D, TN)

    zq_ref[...] = zq.astype(zq_ref.dtype)
    if emit_codes:
        codes_ref[...] = idx
    counts_ref[...] = jnp.sum(r, axis=1, keepdims=True)[None]            # (1, K, 1)

    diff = zq - xp
    if needs_mask:
        diff = diff * valid
    sse = jnp.sum(jnp.sum(diff * diff, axis=1, keepdims=True),
                  axis=0, keepdims=True)                                 # (1, 1)
    sse_ref[...] = sse[None]                                             # (1, 1, 1)


def ema_kmeans_vq_forward(x, proj_w, proj_b, embed,
                          commitment_cost=0.25, return_r=False,
                          max_tile_n=1024):
    """x: (B, C_in, H, W) NCHW.  Returns dict mirroring the torch module."""
    B, Cin, H, W = x.shape
    K, D = embed.shape
    N = B * W * H

    # adaptive, lane-aligned tile size
    tile_n = min(max_tile_n, ((N + 127) // 128) * 128)
    tile_n = max(128, (tile_n // 128) * 128)
    n_tiles = (N + tile_n - 1) // tile_n
    n_pad = n_tiles * tile_n
    needs_mask = n_pad != N

    # match torch: proj (NCHW) then transpose(1,-1) -> (B, W, H, D) -> flatten.
    # projection commutes with the transpose; put features first / positions
    # last so the kernel is lane-dense along N.
    # (B,C,H,W) -> (C,B,W,H) -> (C, N); column n = (b, w, h) row order.
    x_t = jnp.transpose(x, (1, 0, 3, 2)).reshape(Cin, N).astype(jnp.float32)
    if needs_mask:
        x_t = jnp.pad(x_t, ((0, 0), (0, n_pad - N)))

    # grid-invariant precompute (hoisted out of the per-tile body)
    w = proj_w.astype(jnp.float32)                                       # (D, Cin)
    b2 = proj_b.reshape(D, 1).astype(jnp.float32)                        # (D, 1)
    e = embed.astype(jnp.float32)                                        # (K, D)
    ew = jnp.dot(e, w)                                                   # (K, Cin)
    ec = jnp.sum(e * e, axis=1, keepdims=True) - 2.0 * jnp.dot(e, b2)    # (K, 1)
    et = e.T                                                             # (D, K)

    kernel = functools.partial(_vq_kernel, n_valid=N, needs_mask=needs_mask,
                               emit_codes=return_r)

    out_shape = [jax.ShapeDtypeStruct((D, n_pad), x.dtype)]              # z_q
    out_specs = [pl.BlockSpec((D, tile_n), lambda i: (0, i))]
    if return_r:
        out_shape.append(jax.ShapeDtypeStruct((1, n_pad), jnp.int32))    # codes
        out_specs.append(pl.BlockSpec((1, tile_n), lambda i: (0, i)))
    out_shape += [jax.ShapeDtypeStruct((n_tiles, K, 1), jnp.float32),    # counts
                  jax.ShapeDtypeStruct((n_tiles, 1, 1), jnp.float32)]    # SSE
    out_specs += [pl.BlockSpec((1, K, 1), lambda i: (i, 0, 0)),
                  pl.BlockSpec((1, 1, 1), lambda i: (i, 0, 0))]

    bytes_accessed = 4 * (Cin * n_pad + D * n_pad
                          + (n_pad if return_r else 0)
                          + n_tiles * (K + 1))
    flops = 2 * n_pad * (Cin * D + Cin * K + K * D)

    results = pl.pallas_call(
        kernel,
        out_shape=tuple(out_shape),
        grid_spec=pltpu.PrefetchScalarGridSpec(
            num_scalar_prefetch=0,
            grid=(n_tiles,),
            in_specs=[
                pl.BlockSpec((Cin, tile_n), lambda i: (0, i)),
                pl.BlockSpec((D, Cin), lambda i: (0, 0)),
                pl.BlockSpec((D, 1), lambda i: (0, 0)),
                pl.BlockSpec((K, Cin), lambda i: (0, 0)),
                pl.BlockSpec((K, 1), lambda i: (0, 0)),
                pl.BlockSpec((D, K), lambda i: (0, 0)),
            ],
            out_specs=tuple(out_specs),
        ),
        compiler_params=pltpu.CompilerParams(
            dimension_semantics=("parallel",)),
        cost_estimate=pl.CostEstimate(
            flops=flops, transcendentals=0, bytes_accessed=bytes_accessed),
    )(x_t, w, b2, ew, ec, et)

    if return_r:
        zq_t, codes, counts_p, sse_p = results
    else:
        zq_t, counts_p, sse_p = results
        codes = None

    # glue: losses / stats (tiny reductions)
    sse = jnp.sum(sse_p)
    counts = jnp.sum(counts_p, axis=(0, 2))                              # (K,)

    commitment_loss = sse / (N * D)                 # F.mse_loss, mean reduction
    loss = commitment_cost * commitment_loss

    probs = counts / N
    log_perplexity = -jnp.sum(probs * jnp.log(probs + 1e-10))

    num_spatial_positions = N / B
    kldiv_r = math.log(K) * num_spatial_positions * jnp.ones((B, 1), jnp.float32)

    # straight-through output value equals z_q; reshape back to NCHW
    z_q = jnp.transpose(zq_t[:, :N].reshape(D, B, W, H), (1, 0, 3, 2))   # (B,D,H,W)

    out = {"z_q": z_q, "loss": loss, "kldiv_qrpr": kldiv_r,
           "log_perplexity": log_perplexity}
    if return_r:
        out["r"] = jax.nn.one_hot(codes[0, :N], K, dtype=jnp.float32)    # (N, K)
    return out


def _reference_eval(x, proj_w, proj_b, embed):
    """Plain-JAX eval-mode reference (high-precision matmuls)."""
    B, Cin, H, W = x.shape
    K, D = embed.shape
    xp = jnp.einsum("bchw,dc->bdhw", x, proj_w,
                    precision=lax.Precision.HIGHEST) + proj_b[None, :, None, None]
    flat = jnp.transpose(xp, (0, 3, 2, 1)).reshape(-1, D)                # (N, D)
    d2 = (jnp.sum(flat ** 2, axis=1, keepdims=True)
          + jnp.sum(embed ** 2, axis=1)
          - 2.0 * jnp.matmul(flat, embed.T, precision=lax.Precision.HIGHEST))
    codes = jnp.argmin(d2, axis=1)
    zq_flat = embed[codes]
    loss = 0.25 * jnp.mean((zq_flat - flat) ** 2)
    return flat, d2, codes, zq_flat, loss


if __name__ == "__main__":
    # module config: num_embed=32, embed_feats=16, project=True, in_feats=4, in_dim=4
    K, D = 32, 16
    key = jax.random.PRNGKey(0)
    kx, kw, kb, ke, kx2 = jax.random.split(key, 5)
    proj_w = jax.random.normal(kw, (D, 4), jnp.float32) * (1.0 / math.sqrt(4))
    proj_b = jax.random.normal(kb, (D,), jnp.float32) * 0.01
    embed = jax.random.normal(ke, (K, D), jnp.float32)   # nn.init.normal_(std=1.0)

    # ---- case 1: lane-aligned N, single tile, return_r=True ----
    B, Cin, H, W = 2, 4, 16, 16
    x = jax.random.normal(kx, (B, Cin, H, W), jnp.float32)
    out = ema_kmeans_vq_forward(x, proj_w, proj_b, embed, return_r=True)
    jax.block_until_ready(out)

    N = B * H * W
    assert out["z_q"].shape == (B, D, H, W)
    assert out["kldiv_qrpr"].shape == (B, 1)
    assert out["r"].shape == (N, K)
    assert abs(float(jnp.sum(out["r"])) - N) < 1e-3
    assert bool(jnp.isfinite(out["loss"]))
    assert bool(jnp.isfinite(out["log_perplexity"]))

    flat, d2_ref, _, _, loss_ref = _reference_eval(x, proj_w, proj_b, embed)
    codes_k = jnp.argmax(out["r"], axis=1)                               # (N,)
    d2_sel = jnp.take_along_axis(d2_ref, codes_k[:, None], axis=1)[:, 0]
    # kernel's choice must be a (near-)nearest codeword for every position
    assert bool(jnp.all(d2_sel <= jnp.min(d2_ref, axis=1) + 1e-3))
    # z_q must be the codebook rows selected by the codes
    zq_flat = jnp.transpose(out["z_q"], (0, 3, 2, 1)).reshape(-1, D)
    assert float(jnp.max(jnp.abs(zq_flat - embed[codes_k]))) < 1e-4
    # commitment loss matches the reference
    assert abs(float(out["loss"]) - float(loss_ref)) < 5e-3

    # ---- case 2: ragged N (mask path) + multi-tile grid + no codes output ----
    B2, H2, W2 = 2, 15, 16
    x2 = jax.random.normal(kx2, (B2, Cin, H2, W2), jnp.float32)
    out2 = ema_kmeans_vq_forward(x2, proj_w, proj_b, embed,
                                 return_r=False, max_tile_n=128)
    jax.block_until_ready(out2)

    N2 = B2 * H2 * W2
    assert out2["z_q"].shape == (B2, D, H2, W2)
    assert bool(jnp.isfinite(out2["loss"]))
    assert bool(jnp.isfinite(out2["log_perplexity"]))
    _, _, codes2_ref, zq2_ref_flat, loss2_ref = _reference_eval(
        x2, proj_w, proj_b, embed)
    zq2_flat = jnp.transpose(out2["z_q"], (0, 3, 2, 1)).reshape(-1, D)
    assert float(jnp.max(jnp.abs(zq2_flat - zq2_ref_flat))) < 1e-3
    assert abs(float(out2["loss"]) - float(loss2_ref)) < 5e-3

    print("KERNEL_OK")
</pallas_src>

<mosaic_0001>
module attributes {stable_mosaic.version = 11 : i64} {
  func.func @_vq_kernel(%arg0: i32, %arg1: memref<4x512xf32, #tpu.memory_space<vmem>>, %arg2: memref<16x4xf32, #tpu.memory_space<vmem>>, %arg3: memref<16x1xf32, #tpu.memory_space<vmem>>, %arg4: memref<32x4xf32, #tpu.memory_space<vmem>>, %arg5: memref<32x1xf32, #tpu.memory_space<vmem>>, %arg6: memref<16x32xf32, #tpu.memory_space<vmem>>, %arg7: memref<16x512xf32, #tpu.memory_space<vmem>>, %arg8: memref<1x512xi32, #tpu.memory_space<vmem>>, %arg9: memref<1x32x1xf32, #tpu.memory_space<vmem>>, %arg10: memref<1x1x1xf32, #tpu.memory_space<vmem>>) attributes {dimension_semantics = [#tpu.dimension_semantics<parallel>], iteration_bounds = array<i64: 1>, scalar_prefetch = 0 : i64, scratch_operands = 0 : i64, tpu.core_type = #tpu.core_type<tc>, window_params = [{transform_indices = @transform_0, window_bounds = array<i64: 4, 512>}, {pipeline_mode = #tpu.pipeline_mode<synchronous>, transform_indices = @transform_1, window_bounds = array<i64: 16, 4>}, {pipeline_mode = #tpu.pipeline_mode<synchronous>, transform_indices = @transform_2, window_bounds = array<i64: 16, 1>}, {pipeline_mode = #tpu.pipeline_mode<synchronous>, transform_indices = @transform_3, window_bounds = array<i64: 32, 4>}, {pipeline_mode = #tpu.pipeline_mode<synchronous>, transform_indices = @transform_4, window_bounds = array<i64: 32, 1>}, {pipeline_mode = #tpu.pipeline_mode<synchronous>, transform_indices = @transform_5, window_bounds = array<i64: 16, 32>}, {transform_indices = @transform_6, window_bounds = array<i64: 16, 512>}, {transform_indices = @transform_7, window_bounds = array<i64: 1, 512>}, {transform_indices = @transform_8, window_bounds = array<i64: 1, 32, 1>}, {transform_indices = @transform_9, window_bounds = array<i64: 1, 1, 1>}]} {
    %c0 = arith.constant 0 : index
    %c0_0 = arith.constant 0 : index
    %0 = vector.load %arg1[%c0, %c0_0] : memref<4x512xf32, #tpu.memory_space<vmem>>, vector<4x512xf32>
    %c0_1 = arith.constant 0 : index
    %c0_2 = arith.constant 0 : index
    %1 = vector.load %arg2[%c0_1, %c0_2] : memref<16x4xf32, #tpu.memory_space<vmem>>, vector<16x4xf32>
    %c0_3 = arith.constant 0 : index
    %c0_4 = arith.constant 0 : index
    %2 = vector.load %arg3[%c0_3, %c0_4] : memref<16x1xf32, #tpu.memory_space<vmem>>, vector<16x1xf32>
    %c0_5 = arith.constant 0 : index
    %c0_6 = arith.constant 0 : index
    %3 = vector.load %arg4[%c0_5, %c0_6] : memref<32x4xf32, #tpu.memory_space<vmem>>, vector<32x4xf32>
    %c0_7 = arith.constant 0 : index
    %c0_8 = arith.constant 0 : index
    %4 = vector.load %arg5[%c0_7, %c0_8] : memref<32x1xf32, #tpu.memory_space<vmem>>, vector<32x1xf32>
    %c0_9 = arith.constant 0 : index
    %c0_10 = arith.constant 0 : index
    %5 = vector.load %arg6[%c0_9, %c0_10] : memref<16x32xf32, #tpu.memory_space<vmem>>, vector<16x32xf32>
    %cst = arith.constant dense<0.000000e+00> : vector<16x512xf32>
    %6 = tpu.matmul %1, %0, %cst {dimension_numbers = #tpu.dot_dimension_numbers<[1], [0], [0], [1], [0, 0, 1, 1], [], []>} : vector<16x4xf32>, vector<4x512xf32>, vector<16x512xf32> -> vector<16x512xf32>
    %7 = vector.broadcast %2 : vector<16x1xf32> to vector<16x512xf32>
    %8 = arith.addf %6, %7 : vector<16x512xf32>
    %cst_11 = arith.constant dense<0.000000e+00> : vector<32x512xf32>
    %9 = tpu.matmul %3, %0, %cst_11 {dimension_numbers = #tpu.dot_dimension_numbers<[1], [0], [0], [1], [0, 0, 1, 1], [], []>} : vector<32x4xf32>, vector<4x512xf32>, vector<32x512xf32> -> vector<32x512xf32>
    %10 = arith.mulf %8, %8 : vector<16x512xf32>
    %cst_12 = arith.constant dense<0.000000e+00> : vector<512xf32>
    %11 = vector.multi_reduction <add>, %10, %cst_12 [0] : vector<16x512xf32> to vector<512xf32>
    %12 = vector.shape_cast %11 : vector<512xf32> to vector<1x512xf32>
    %13 = vector.broadcast %12 : vector<1x512xf32> to vector<32x512xf32>
    %14 = vector.broadcast %4 : vector<32x1xf32> to vector<32x512xf32>
    %15 = arith.addf %13, %14 : vector<32x512xf32>
    %cst_13 = arith.constant 2.000000e+00 : f32
    %16 = vector.broadcast %cst_13 : f32 to vector<32x512xf32>
    %17 = arith.mulf %16, %9 : vector<32x512xf32>
    %18 = arith.subf %15, %17 : vector<32x512xf32>
    %cst_14 = arith.constant dense<0x7F800000> : vector<512xf32>
    %19 = vector.multi_reduction <minimumf>, %18, %cst_14 [0] : vector<32x512xf32> to vector<512xf32>
    %20 = vector.shape_cast %19 : vector<512xf32> to vector<1x512xf32>
    %21 = tpu.iota {dimensions = array<i32: 0>} : vector<32x512xi32>
    %22 = vector.broadcast %20 : vector<1x512xf32> to vector<32x512xf32>
    %23 = arith.cmpf oeq, %18, %22 : vector<32x512xf32>
    %c32_i32 = arith.constant 32 : i32
    %24 = vector.broadcast %c32_i32 : i32 to vector<32x512xi32>
    %25 = arith.select %23, %21, %24 : vector<32x512xi1>, vector<32x512xi32>
    %cst_15 = arith.constant dense<2147483647> : vector<512xi32>
    %26 = vector.multi_reduction <minsi>, %25, %cst_15 [0] : vector<32x512xi32> to vector<512xi32>
    %27 = vector.shape_cast %26 : vector<512xi32> to vector<1x512xi32>
    %28 = vector.broadcast %27 : vector<1x512xi32> to vector<32x512xi32>
    %29 = arith.cmpi eq, %21, %28 : vector<32x512xi32>
    %30 = arith.extui %29 : vector<32x512xi1> to vector<32x512xi32>
    %31 = arith.sitofp %30 : vector<32x512xi32> to vector<32x512xf32>
    %cst_16 = arith.constant dense<0.000000e+00> : vector<16x512xf32>
    %32 = tpu.matmul %5, %31, %cst_16 {dimension_numbers = #tpu.dot_dimension_numbers<[1], [0], [0], [1], [0, 0, 1, 1], [], []>} : vector<16x32xf32>, vector<32x512xf32>, vector<16x512xf32> -> vector<16x512xf32>
    %c0_17 = arith.constant 0 : index
    %c0_18 = arith.constant 0 : index
    %33 = vector.load %arg7[%c0_17, %c0_18] : memref<16x512xf32, #tpu.memory_space<vmem>>, vector<16x512xf32>
    tpu.vector_store %arg7[%c0_17, %c0_18], %32 {strides = array<i32>} : memref<16x512xf32, #tpu.memory_space<vmem>>, vector<16x512xf32>,
    %c0_19 = arith.constant 0 : index
    %c0_20 = arith.constant 0 : index
    %34 = vector.load %arg8[%c0_19, %c0_20] : memref<1x512xi32, #tpu.memory_space<vmem>>, vector<1x512xi32>
    tpu.vector_store %arg8[%c0_19, %c0_20], %27 {strides = array<i32>} : memref<1x512xi32, #tpu.memory_space<vmem>>, vector<1x512xi32>,
    %cst_21 = arith.constant dense<0.000000e+00> : vector<32xf32>
    %35 = vector.multi_reduction <add>, %31, %cst_21 [1] : vector<32x512xf32> to vector<32xf32>
    %36 = vector.shape_cast %35 : vector<32xf32> to vector<32x1xf32>
    %37 = vector.shape_cast %36 : vector<32x1xf32> to vector<1x32x1xf32>
    %c0_22 = arith.constant 0 : index
    %c0_23 = arith.constant 0 : index
    %c0_24 = arith.constant 0 : index
    %38 = vector.load %arg9[%c0_22, %c0_23, %c0_24] : memref<1x32x1xf32, #tpu.memory_space<vmem>>, vector<1x32x1xf32>
    tpu.vector_store %arg9[%c0_22, %c0_23, %c0_24], %37 {strides = array<i32>} : memref<1x32x1xf32, #tpu.memory_space<vmem>>, vector<1x32x1xf32>,
    %39 = arith.subf %32, %8 : vector<16x512xf32>
    %40 = arith.mulf %39, %39 : vector<16x512xf32>
    %cst_25 = arith.constant dense<0.000000e+00> : vector<16xf32>
    %41 = vector.multi_reduction <add>, %40, %cst_25 [1] : vector<16x512xf32> to vector<16xf32>
    %42 = vector.shape_cast %41 : vector<16xf32> to vector<16x1xf32>
    %cst_26 = arith.constant dense<0.000000e+00> : vector<1xf32>
    %43 = vector.multi_reduction <add>, %42, %cst_26 [0] : vector<16x1xf32> to vector<1xf32>
    %44 = vector.shape_cast %43 : vector<1xf32> to vector<1x1xf32>
    %45 = vector.shape_cast %44 : vector<1x1xf32> to vector<1x1x1xf32>
    %c0_27 = arith.constant 0 : index
    %c0_28 = arith.constant 0 : index
    %c0_29 = arith.constant 0 : index
    %46 = vector.load %arg10[%c0_27, %c0_28, %c0_29] : memref<1x1x1xf32, #tpu.memory_space<vmem>>, vector<1x1x1xf32>
    tpu.vector_store %arg10[%c0_27, %c0_28, %c0_29], %45 {strides = array<i32>} : memref<1x1x1xf32, #tpu.memory_space<vmem>>, vector<1x1x1xf32>,
    return
  }
  func.func @transform_0(%arg0: i32) -> (i32, i32) {
    %c0_i32 = arith.constant 0 : i32
    %c0_i32_0 = arith.constant 0 : i32
    return %c0_i32, %arg0 : i32, i32
  }
  func.func @transform_1(%arg0: i32) -> (i32, i32) {
    %c0_i32 = arith.constant 0 : i32
    %c0_i32_0 = arith.constant 0 : i32
    %c0_i32_1 = arith.constant 0 : i32
    return %c0_i32, %c0_i32_0 : i32, i32
  }
  func.func @transform_2(%arg0: i32) -> (i32, i32) {
    %c0_i32 = arith.constant 0 : i32
    %c0_i32_0 = arith.constant 0 : i32
    %c0_i32_1 = arith.constant 0 : i32
    return %c0_i32, %c0_i32_0 : i32, i32
  }
  func.func @transform_3(%arg0: i32) -> (i32, i32) {
    %c0_i32 = arith.constant 0 : i32
    %c0_i32_0 = arith.constant 0 : i32
    %c0_i32_1 = arith.constant 0 : i32
    return %c0_i32, %c0_i32_0 : i32, i32
  }
  func.func @transform_4(%arg0: i32) -> (i32, i32) {
    %c0_i32 = arith.constant 0 : i32
    %c0_i32_0 = arith.constant 0 : i32
    %c0_i32_1 = arith.constant 0 : i32
    return %c0_i32, %c0_i32_0 : i32, i32
  }
  func.func @transform_5(%arg0: i32) -> (i32, i32) {
    %c0_i32 = arith.constant 0 : i32
    %c0_i32_0 = arith.constant 0 : i32
    %c0_i32_1 = arith.constant 0 : i32
    return %c0_i32, %c0_i32_0 : i32, i32
  }
  func.func @transform_6(%arg0: i32) -> (i32, i32) {
    %c0_i32 = arith.constant 0 : i32
    %c0_i32_0 = arith.constant 0 : i32
    return %c0_i32, %arg0 : i32, i32
  }
  func.func @transform_7(%arg0: i32) -> (i32, i32) {
    %c0_i32 = arith.constant 0 : i32
    %c0_i32_0 = arith.constant 0 : i32
    return %c0_i32, %arg0 : i32, i32
  }
  func.func @transform_8(%arg0: i32) -> (i32, i32, i32) {
    %c0_i32 = arith.constant 0 : i32
    %c0_i32_0 = arith.constant 0 : i32
    %c0_i32_1 = arith.constant 0 : i32
    return %arg0, %c0_i32, %c0_i32_0 : i32, i32, i32
  }
  func.func @transform_9(%arg0: i32) -> (i32, i32, i32) {
    %c0_i32 = arith.constant 0 : i32
    %c0_i32_0 = arith.constant 0 : i32
    %c0_i32_1 = arith.constant 0 : i32
    return %arg0, %c0_i32, %c0_i32_0 : i32, i32, i32
  }
}

</mosaic_0001>

<llo_original>
// kernel: tpu_custom_call.1
$region0: #{tpu_custom_call.1}
  #allocation0 [shape = 'u32[]', space=smem, size = 0x4, offset = 0x4, fixed_abs, tag = 'smem constant byte address 0x4 - core index']
  #allocation1 [shape = 'u32[144,128]{1,0:T(1,128)}', space=vmem, size = 0x12000, scoped, tag = 'internal scratch']
  %s0 = inlined_call_operand.vmem [shape: f32[4,512], index: 0, kind: input, shape index: {}]
  %s1 = inlined_call_operand.vmem [shape: f32[16,4], index: 1, kind: input, shape index: {}]
  %s2 = inlined_call_operand.vmem [shape: f32[16,1], index: 2, kind: input, shape index: {}]
  %s3 = inlined_call_operand.vmem [shape: f32[32,4], index: 3, kind: input, shape index: {}]
  %s4 = inlined_call_operand.vmem [shape: f32[32,1], index: 4, kind: input, shape index: {}]
  %s5 = inlined_call_operand.vmem [shape: f32[16,32], index: 5, kind: input, shape index: {}]
  %s6 = inlined_call_operand.hbm [shape: f32[16,512], index: 6, kind: output, shape index: {0}]
  %s7 = inlined_call_operand.hbm [shape: s32[1,512], index: 7, kind: output, shape index: {1}]
  %s8 = inlined_call_operand.vmem [shape: f32[1,32,1], index: 8, kind: output, shape index: {2}]
  %s9 = inlined_call_operand.hbm [shape: f32[1,1,1], index: 9, kind: output, shape index: {3}]
  %10 = xla_tuple %s6, %s7, %s8, %s9
  %s11 = sld [smem:[#allocation0]]
  $region58: #{tpu_custom_call.1} parent=0
    _
  %s13 = ssub.s32 1, %s11
  %s14 = scalar_select 0, %s13, %s11
  $region1: #{tpu_custom_call.1} parent=0
    #allocation2 [shape = 'u8[32768]{0}', space=vmem, size = 0x8000, scoped, tag = 'output window, operand 0, single buffered']
    #allocation3 [shape = 's32[1]{0}', space=sflag, size = 0x4, scoped, tag = 'scoped memory for tpu_custom_call.1']
    #allocation4 [shape = 'u8[2048]{0}', space=vmem, size = 0x800, scoped, tag = 'output window, operand 1, single buffered']
    #allocation5 [shape = 's32[1]{0}', space=sflag, size = 0x4, scoped, tag = 'scoped memory for tpu_custom_call.1']
    #allocation6 [shape = 'u8[512]{0}', space=vmem, size = 0x400, scoped, tag = 'output window, operand 3, single buffered']
    %15 = vsyncpa [#allocation3], 0
    %16 = vsyncpa [#allocation5], 0
    // Predicated region
    $region2: #{tpu_custom_call.1} parent=1 // pred_check
      _
    $region3: #{tpu_custom_call.1} parent=1 // pred_check_branch
      %18 = sbr.rel (0) target = $region5
    $region4: #{tpu_custom_call.1} parent=1 // pred_region
      _
    $region5: #{tpu_custom_call.1} parent=1 // pred_fallthru
      _
    // Predicated region
    $region6: #{tpu_custom_call.1} parent=1 // pred_check
      _
    $region7: #{tpu_custom_call.1} parent=1 // pred_check_branch
      %20 = sbr.rel (0) target = $region9
    $region8: #{tpu_custom_call.1} parent=1 // pred_region
      _
    $region9: #{tpu_custom_call.1} parent=1 // pred_fallthru
      _
    // Predicated region
    $region10: #{tpu_custom_call.1} parent=1 // pred_check
      _
    $region11: #{tpu_custom_call.1} parent=1 // pred_check_branch
      %22 = sbr.rel (0) target = $region13
    $region12: #{tpu_custom_call.1} parent=1 // pred_region
      _
    $region13: #{tpu_custom_call.1} parent=1 // pred_fallthru
      _
    // Predicated region
    $region14: #{tpu_custom_call.1} parent=1 // pred_check
      _
    $region15: #{tpu_custom_call.1} parent=1 // pred_check_branch
      %24 = sbr.rel (0) target = $region17
    $region16: #{tpu_custom_call.1} parent=1 // pred_region
      _
    $region17: #{tpu_custom_call.1} parent=1 // pred_fallthru
      _
    // Predicated region
    $region18: #{tpu_custom_call.1} parent=1 // pred_check
      _
    $region19: #{tpu_custom_call.1} parent=1 // pred_check_branch
      %26 = sbr.rel (0) target = $region21
    $region20: #{tpu_custom_call.1} parent=1 // pred_region
      _
    $region21: #{tpu_custom_call.1} parent=1 // pred_fallthru
      _
    // Predicated region
    $region22: #{tpu_custom_call.1} parent=1 // pred_check
      _
    $region23: #{tpu_custom_call.1} parent=1 // pred_check_branch
      %28 = sbr.rel (0) target = $region25
    $region24: #{tpu_custom_call.1} parent=1 // pred_region
      _
    $region25: #{tpu_custom_call.1} parent=1 // pred_fallthru
      _
    %v29 = vld [vmem:[%s0] sm:$0xff]
    %v30 = vld [vmem:[%s0 + $0x8] sm:$0xff]
    %v31 = vld [vmem:[%s1] sm:$0xff]
    %v32 = vld [vmem:[%s1 + $0x8] sm:$0xff]
    %v33 = vld [vmem:[%s2] sm:$0xff]
    %v34 = vld [vmem:[%s2 + $0x8] sm:$0xff]
    %v35 = vld [vmem:[%s3] sm:$0xff]
    %v36 = vld [vmem:[%s3 + $0x8] sm:$0xff]
    %v37 = vld [vmem:[%s3 + $0x10] sm:$0xff]
    %v38 = vld [vmem:[%s3 + $0x18] sm:$0xff]
    %v39 = vld [vmem:[%s4] sm:$0xff]
    %v40 = vld [vmem:[%s4 + $0x8] sm:$0xff]
    %v41 = vld [vmem:[%s4 + $0x10] sm:$0xff]
    %v42 = vld [vmem:[%s4 + $0x18] sm:$0xff]
    %v43 = vld [vmem:[%s5] sm:$0xff]
    %v44 = vld [vmem:[%s5 + $0x8] sm:$0xff]
    %46 = vset.pattern.permute.xlu0 0
    %47 = vperm.xlu0 %46, %v33
    %v48 = vpop.permute.xlu0 %47
    %51 = vset.pattern.permute.xlu0 0
    %52 = vperm.xlu0 %51, %v34
    %v53 = vpop.permute.xlu0 %52
    %v57 = vcombine.high %v29, %v29
    %v58 = vcombine.high %v30, %v30
    %vm59 = vcmask 31744
    %v61 = vsel %vm59, %v31, 0
    %v64 = vsel %vm59, %v32, 0
    %vm66 = vcmask 1043456
    %v67 = vsel %vm66, %v29, 0
    %v69 = vsel %vm66, %v57, 0
    %v71 = vsel %vm66, %v30, 0
    %v73 = vsel %vm66, %v58, 0
    %75 = vmatprep.subr.mxu0 0.0
    %76 = vmatpush1.msra.mxu0 0.0
    %77 = vmatprep.subr.mxu0 0.0
    %78 = vmatpush1.msra.mxu0 0.0
    %79 = vmatprep.subr.mxu0 0.0
    %80 = vmatpush1.msra.mxu0 0.0
    %81 = vmatprep.subr.mxu0 0.0
    %82 = vmatpush1.msra.mxu0 0.0
    %83 = vmatprep.subr.mxu0 0.0
    %84 = vmatpush1.msra.mxu0 0.0
    %85 = vmatprep.subr.mxu0 0.0
    %86 = vmatpush1.msra.mxu0 0.0
    %87 = vmatprep.subr.mxu0 0.0
    %88 = vmatpush1.msra.mxu0 0.0
    %89 = vmatprep.subr.mxu0 0.0
    %90 = vmatpush1.msra.mxu0 0.0
    %91 = vmatprep.subr.mxu0 0.0
    %92 = vmatpush1.msra.mxu0 0.0
    %93 = vmatprep.subr.mxu0 0.0
    %94 = vmatpush1.msra.mxu0 0.0
    %95 = vmatprep.subr.mxu0 0.0
    %96 = vmatpush1.msra.mxu0 0.0
    %97 = vmatprep.subr.mxu0 0.0
    %98 = vmatpush1.msra.mxu0 0.0
    %99 = vmatprep.subr.mxu0 0.0
    %100 = vmatpush1.msra.mxu0 0.0
    %101 = vmatprep.subr.mxu0 0.0
    %102 = vmatpush1.msra.mxu0 0.0
    %103 = vmatprep.subr.mxu0 0.0
    %104 = vmatpush1.msra.mxu0 0.0
    %105 = vmatprep.subr.mxu0 %v69
    %106 = vmatpush1.msra.mxu0 %v67
    %107 = vmatprep.subr.mxu0 0.0
    %108 = vmatpush2.msra.mxu0 0.0
    %109 = vmatprep.subr.mxu0 0.0
    %110 = vmatpush2.msra.mxu0 0.0
    %111 = vmatprep.subr.mxu0 0.0
    %112 = vmatpush2.msra.mxu0 0.0
    %113 = vmatprep.subr.mxu0 0.0
    %114 = vmatpush2.msra.mxu0 0.0
    %115 = vmatprep.subr.mxu0 0.0
    %116 = vmatpush2.msra.mxu0 0.0
    %117 = vmatprep.subr.mxu0 0.0
    %118 = vmatpush2.msra.mxu0 0.0
    %119 = vmatprep.subr.mxu0 0.0
    %120 = vmatpush2.msra.mxu0 0.0
    %121 = vmatprep.subr.mxu0 0.0
    %122 = vmatpush2.msra.mxu0 0.0
    %123 = vmatprep.subr.mxu0 0.0
    %124 = vmatpush2.msra.mxu0 0.0
    %125 = vmatprep.subr.mxu0 0.0
    %126 = vmatpush2.msra.mxu0 0.0
    %127 = vmatprep.subr.mxu0 0.0
    %128 = vmatpush2.msra.mxu0 0.0
    %129 = vmatprep.subr.mxu0 0.0
    %130 = vmatpush2.msra.mxu0 0.0
    %131 = vmatprep.subr.mxu0 0.0
    %132 = vmatpush2.msra.mxu0 0.0
    %133 = vmatprep.subr.mxu0 0.0
    %134 = vmatpush2.msra.mxu0 0.0
    %135 = vmatprep.subr.mxu0 0.0
    %136 = vmatpush2.msra.mxu0 0.0
    %137 = vmatprep.subr.mxu0 0.0
    %138 = vmatpush2.msra.mxu0 0.0
    %139 = vmatprep.mubr.f32.mxu0 0.0
    %140 = vmatmul.mubr.f32.gmra.mxu0 %v61
    %v141 = vpop.f32.mrf.mxu0
    %v142 = vadd.f32 %v48, %v141
    %v143 = vpop.f32.mrf.mxu0
    %v144 = vadd.f32 %v48, %v143
    %145 = vmatprep.mubr.f32.mxu0 0.0
    %146 = vmatmul.mubr.f32.gmra.mxu0 %v64
    %v147 = vpop.f32.mrf.mxu0
    %v148 = vadd.f32 %v53, %v147
    %v149 = vpop.f32.mrf.mxu0
    %v150 = vadd.f32 %v53, %v149
    %151 = vdwg.mxu0
    %152 = vmatprep.subr.mxu0 0.0
    %153 = vmatpush1.msra.mxu0 0.0
    %154 = vmatprep.subr.mxu0 0.0
    %155 = vmatpush1.msra.mxu0 0.0
    %156 = vmatprep.subr.mxu0 0.0
    %157 = vmatpush1.msra.mxu0 0.0
    %158 = vmatprep.subr.mxu0 0.0
    %159 = vmatpush1.msra.mxu0 0.0
    %160 = vmatprep.subr.mxu0 0.0
    %161 = vmatpush1.msra.mxu0 0.0
    %162 = vmatprep.subr.mxu0 0.0
    %163 = vmatpush1.msra.mxu0 0.0
    %164 = vmatprep.subr.mxu0 0.0
    %165 = vmatpush1.msra.mxu0 0.0
    %166 = vmatprep.subr.mxu0 0.0
    %167 = vmatpush1.msra.mxu0 0.0
    %168 = vmatprep.subr.mxu0 0.0
    %169 = vmatpush1.msra.mxu0 0.0
    %170 = vmatprep.subr.mxu0 0.0
    %171 = vmatpush1.msra.mxu0 0.0
    %172 = vmatprep.subr.mxu0 0.0
    %173 = vmatpush1.msra.mxu0 0.0
    %174 = vmatprep.subr.mxu0 0.0
    %175 = vmatpush1.msra.mxu0 0.0
    %176 = vmatprep.subr.mxu0 0.0
    %177 = vmatpush1.msra.mxu0 0.0
    %178 = vmatprep.subr.mxu0 0.0
    %179 = vmatpush1.msra.mxu0 0.0
    %180 = vmatprep.subr.mxu0 0.0
    %181 = vmatpush1.msra.mxu0 0.0
    %182 = vmatprep.subr.mxu0 %v73
    %183 = vmatpush1.msra.mxu0 %v71
    %184 = vmatprep.subr.mxu0 0.0
    %185 = vmatpush2.msra.mxu0 0.0
    %186 = vmatprep.subr.mxu0 0.0
    %187 = vmatpush2.msra.mxu0 0.0
    %188 = vmatprep.subr.mxu0 0.0
    %189 = vmatpush2.msra.mxu0 0.0
    %190 = vmatprep.subr.mxu0 0.0
    %191 = vmatpush2.msra.mxu0 0.0
    %192 = vmatprep.subr.mxu0 0.0
    %193 = vmatpush2.msra.mxu0 0.0
    %194 = vmatprep.subr.mxu0 0.0
    %195 = vmatpush2.msra.mxu0 0.0
    %196 = vmatprep.subr.mxu0 0.0
    %197 = vmatpush2.msra.mxu0 0.0
    %198 = vmatprep.subr.mxu0 0.0
    %199 = vmatpush2.msra.mxu0 0.0
    %200 = vmatprep.subr.mxu0 0.0
    %201 = vmatpush2.msra.mxu0 0.0
    %202 = vmatprep.subr.mxu0 0.0
    %203 = vmatpush2.msra.mxu0 0.0
    %204 = vmatprep.subr.mxu0 0.0
    %205 = vmatpush2.msra.mxu0 0.0
    %206 = vmatprep.subr.mxu0 0.0
    %207 = vmatpush2.msra.mxu0 0.0
    %208 = vmatprep.subr.mxu0 0.0
    %209 = vmatpush2.msra.mxu0 0.0
    %210 = vmatprep.subr.mxu0 0.0
    %211 = vmatpush2.msra.mxu0 0.0
    %212 = vmatprep.subr.mxu0 0.0
    %213 = vmatpush2.msra.mxu0 0.0
    %214 = vmatprep.subr.mxu0 0.0
    %215 = vmatpush2.msra.mxu0 0.0
    %216 = vmatprep.mubr.f32.mxu0 0.0
    %217 = vmatmul.mubr.f32.gmra.mxu0 %v61
    %v218 = vpop.f32.mrf.mxu0
    %v219 = vadd.f32 %v48, %v218
    %v220 = vpop.f32.mrf.mxu0
    %v221 = vadd.f32 %v48, %v220
    %222 = vmatprep.mubr.f32.mxu0 0.0
    %223 = vmatmul.mubr.f32.gmra.mxu0 %v64
    %v224 = vpop.f32.mrf.mxu0
    %v225 = vadd.f32 %v53, %v224
    %v226 = vpop.f32.mrf.mxu0
    %v227 = vadd.f32 %v53, %v226
    %228 = vdwg.mxu0
    %v230 = vsel %vm59, %v35, 0
    %v233 = vsel %vm59, %v36, 0
    %v236 = vsel %vm59, %v37, 0
    %v239 = vsel %vm59, %v38, 0
    %241 = vmatprep.subr.mxu0 0.0
    %242 = vmatpush1.msra.mxu0 0.0
    %243 = vmatprep.subr.mxu0 0.0
    %244 = vmatpush1.msra.mxu0 0.0
    %245 = vmatprep.subr.mxu0 0.0
    %246 = vmatpush1.msra.mxu0 0.0
    %247 = vmatprep.subr.mxu0 0.0
    %248 = vmatpush1.msra.mxu0 0.0
    %249 = vmatprep.subr.mxu0 0.0
    %250 = vmatpush1.msra.mxu0 0.0
    %251 = vmatprep.subr.mxu0 0.0
    %252 = vmatpush1.msra.mxu0 0.0
    %253 = vmatprep.subr.mxu0 0.0
    %254 = vmatpush1.msra.mxu0 0.0
    %255 = vmatprep.subr.mxu0 0.0
    %256 = vmatpush1.msra.mxu0 0.0
    %257 = vmatprep.subr.mxu0 0.0
    %258 = vmatpush1.msra.mxu0 0.0
    %259 = vmatprep.subr.mxu0 0.0
    %260 = vmatpush1.msra.mxu0 0.0
    %261 = vmatprep.subr.mxu0 0.0
    %262 = vmatpush1.msra.mxu0 0.0
    %263 = vmatprep.subr.mxu0 0.0
    %264 = vmatpush1.msra.mxu0 0.0
    %265 = vmatprep.subr.mxu0 0.0
    %266 = vmatpush1.msra.mxu0 0.0
    %267 = vmatprep.subr.mxu0 0.0
    %268 = vmatpush1.msra.mxu0 0.0
    %269 = vmatprep.subr.mxu0 0.0
    %270 = vmatpush1.msra.mxu0 0.0
    %271 = vmatprep.subr.mxu0 %v69
    %272 = vmatpush1.msra.mxu0 %v67
    %273 = vmatprep.subr.mxu0 0.0
    %274 = vmatpush2.msra.mxu0 0.0
    %275 = vmatprep.subr.mxu0 0.0
    %276 = vmatpush2.msra.mxu0 0.0
    %277 = vmatprep.subr.mxu0 0.0
    %278 = vmatpush2.msra.mxu0 0.0
    %279 = vmatprep.subr.mxu0 0.0
    %280 = vmatpush2.msra.mxu0 0.0
    %281 = vmatprep.subr.mxu0 0.0
    %282 = vmatpush2.msra.mxu0 0.0
    %283 = vmatprep.subr.mxu0 0.0
    %284 = vmatpush2.msra.mxu0 0.0
    %285 = vmatprep.subr.mxu0 0.0
    %286 = vmatpush2.msra.mxu0 0.0
    %287 = vmatprep.subr.mxu0 0.0
    %288 = vmatpush2.msra.mxu0 0.0
    %289 = vmatprep.subr.mxu0 0.0
    %290 = vmatpush2.msra.mxu0 0.0
    %291 = vmatprep.subr.mxu0 0.0
    %292 = vmatpush2.msra.mxu0 0.0
    %293 = vmatprep.subr.mxu0 0.0
    %294 = vmatpush2.msra.mxu0 0.0
    %295 = vmatprep.subr.mxu0 0.0
    %296 = vmatpush2.msra.mxu0 0.0
    %297 = vmatprep.subr.mxu0 0.0
    %298 = vmatpush2.msra.mxu0 0.0
    %299 = vmatprep.subr.mxu0 0.0
    %300 = vmatpush2.msra.mxu0 0.0
    %301 = vmatprep.subr.mxu0 0.0
    %302 = vmatpush2.msra.mxu0 0.0
    %303 = vmatprep.subr.mxu0 0.0
    %304 = vmatpush2.msra.mxu0 0.0
    %305 = vmatprep.mubr.f32.mxu0 0.0
    %306 = vmatmul.mubr.f32.gmra.mxu0 %v230
    %v307 = vpop.f32.mrf.mxu0
    %v308 = vadd.f32 0.0, %v307
    %v309 = vpop.f32.mrf.mxu0
    %v310 = vadd.f32 0.0, %v309
    %311 = vmatprep.mubr.f32.mxu0 0.0
    %312 = vmatmul.mubr.f32.gmra.mxu0 %v233
    %v313 = vpop.f32.mrf.mxu0
    %v314 = vadd.f32 0.0, %v313
    %v315 = vpop.f32.mrf.mxu0
    %v316 = vadd.f32 0.0, %v315
    %317 = vmatprep.mubr.f32.mxu0 0.0
    %318 = vmatmul.mubr.f32.gmra.mxu0 %v236
    %v319 = vpop.f32.mrf.mxu0
    %v320 = vadd.f32 0.0, %v319
    %v321 = vpop.f32.mrf.mxu0
    %v322 = vadd.f32 0.0, %v321
    %323 = vmatprep.mubr.f32.mxu0 0.0
    %324 = vmatmul.mubr.f32.gmra.mxu0 %v239
    %v325 = vpop.f32.mrf.mxu0
    %v326 = vadd.f32 0.0, %v325
    %v327 = vpop.f32.mrf.mxu0
    %v328 = vadd.f32 0.0, %v327
    %329 = vdwg.mxu0
    %330 = vmatprep.subr.mxu0 0.0
    %331 = vmatpush1.msra.mxu0 0.0
    %332 = vmatprep.subr.mxu0 0.0
    %333 = vmatpush1.msra.mxu0 0.0
    %334 = vmatprep.subr.mxu0 0.0
    %335 = vmatpush1.msra.mxu0 0.0
    %336 = vmatprep.subr.mxu0 0.0
    %337 = vmatpush1.msra.mxu0 0.0
    %338 = vmatprep.subr.mxu0 0.0
    %339 = vmatpush1.msra.mxu0 0.0
    %340 = vmatprep.subr.mxu0 0.0
    %341 = vmatpush1.msra.mxu0 0.0
    %342 = vmatprep.subr.mxu0 0.0
    %343 = vmatpush1.msra.mxu0 0.0
    %344 = vmatprep.subr.mxu0 0.0
    %345 = vmatpush1.msra.mxu0 0.0
    %346 = vmatprep.subr.mxu0 0.0
    %347 = vmatpush1.msra.mxu0 0.0
    %348 = vmatprep.subr.mxu0 0.0
    %349 = vmatpush1.msra.mxu0 0.0
    %350 = vmatprep.subr.mxu0 0.0
    %351 = vmatpush1.msra.mxu0 0.0
    %352 = vmatprep.subr.mxu0 0.0
    %353 = vmatpush1.msra.mxu0 0.0
    %354 = vmatprep.subr.mxu0 0.0
    %355 = vmatpush1.msra.mxu0 0.0
    %356 = vmatprep.subr.mxu0 0.0
    %357 = vmatpush1.msra.mxu0 0.0
    %358 = vmatprep.subr.mxu0 0.0
    %359 = vmatpush1.msra.mxu0 0.0
    %360 = vmatprep.subr.mxu0 %v73
    %361 = vmatpush1.msra.mxu0 %v71
    %362 = vmatprep.subr.mxu0 0.0
    %363 = vmatpush2.msra.mxu0 0.0
    %364 = vmatprep.subr.mxu0 0.0
    %365 = vmatpush2.msra.mxu0 0.0
    %366 = vmatprep.subr.mxu0 0.0
    %367 = vmatpush2.msra.mxu0 0.0
    %368 = vmatprep.subr.mxu0 0.0
    %369 = vmatpush2.msra.mxu0 0.0
    %370 = vmatprep.subr.mxu0 0.0
    %371 = vmatpush2.msra.mxu0 0.0
    %372 = vmatprep.subr.mxu0 0.0
    %373 = vmatpush2.msra.mxu0 0.0
    %374 = vmatprep.subr.mxu0 0.0
    %375 = vmatpush2.msra.mxu0 0.0
    %376 = vmatprep.subr.mxu0 0.0
    %377 = vmatpush2.msra.mxu0 0.0
    %378 = vmatprep.subr.mxu0 0.0
    %379 = vmatpush2.msra.mxu0 0.0
    %380 = vmatprep.subr.mxu0 0.0
    %381 = vmatpush2.msra.mxu0 0.0
    %382 = vmatprep.subr.mxu0 0.0
    %383 = vmatpush2.msra.mxu0 0.0
    %384 = vmatprep.subr.mxu0 0.0
    %385 = vmatpush2.msra.mxu0 0.0
    %386 = vmatprep.subr.mxu0 0.0
    %387 = vmatpush2.msra.mxu0 0.0
    %388 = vmatprep.subr.mxu0 0.0
    %389 = vmatpush2.msra.mxu0 0.0
    %390 = vmatprep.subr.mxu0 0.0
    %391 = vmatpush2.msra.mxu0 0.0
    %392 = vmatprep.subr.mxu0 0.0
    %393 = vmatpush2.msra.mxu0 0.0
    %394 = vmatprep.mubr.f32.mxu0 0.0
    %395 = vmatmul.mubr.f32.gmra.mxu0 %v230
    %v396 = vpop.f32.mrf.mxu0
    %v397 = vadd.f32 0.0, %v396
    %v398 = vpop.f32.mrf.mxu0
    %v399 = vadd.f32 0.0, %v398
    %400 = vmatprep.mubr.f32.mxu0 0.0
    %401 = vmatmul.mubr.f32.gmra.mxu0 %v233
    %v402 = vpop.f32.mrf.mxu0
    %v403 = vadd.f32 0.0, %v402
    %v404 = vpop.f32.mrf.mxu0
    %v405 = vadd.f32 0.0, %v404
    %406 = vmatprep.mubr.f32.mxu0 0.0
    %407 = vmatmul.mubr.f32.gmra.mxu0 %v236
    %v408 = vpop.f32.mrf.mxu0
    %v409 = vadd.f32 0.0, %v408
    %v410 = vpop.f32.mrf.mxu0
    %v411 = vadd.f32 0.0, %v410
    %412 = vmatprep.mubr.f32.mxu0 0.0
    %413 = vmatmul.mubr.f32.gmra.mxu0 %v239
    %v414 = vpop.f32.mrf.mxu0
    %v415 = vadd.f32 0.0, %v414
    %v416 = vpop.f32.mrf.mxu0
    %v417 = vadd.f32 0.0, %v416
    %418 = vdwg.mxu0
    %v419 = vmul.f32 %v142, %v142
    %v420 = vmul.f32 %v144, %v144
    %v421 = vmul.f32 %v219, %v219
    %v422 = vmul.f32 %v221, %v221
    %v423 = vmul.f32 %v148, %v148
    %v424 = vmul.f32 %v150, %v150
    %v425 = vmul.f32 %v225, %v225
    %v426 = vmul.f32 %v227, %v227
    %v427 = vadd.f32 %v419, %v423
    %v428 = vrot.slane %v427, 4
    %v429 = vadd.f32 %v427, %v428
    %v430 = vrot.slane %v429, 2
    %v431 = vadd.f32 %v429, %v430
    %v432 = vrot.slane %v431, 1
    %v433 = vadd.f32 %v431, %v432
    %v434 = vadd.f32 %v420, %v424
    %v435 = vrot.slane %v434, 4
    %v436 = vadd.f32 %v434, %v435
    %v437 = vrot.slane %v436, 2
    %v438 = vadd.f32 %v436, %v437
    %v439 = vrot.slane %v438, 1
    %v440 = vadd.f32 %v438, %v439
    %v441 = vadd.f32 %v421, %v425
    %v442 = vrot.slane %v441, 4
    %v443 = vadd.f32 %v441, %v442
    %v444 = vrot.slane %v443, 2
    %v445 = vadd.f32 %v443, %v444
    %v446 = vrot.slane %v445, 1
    %v447 = vadd.f32 %v445, %v446
    %v448 = vadd.f32 %v422, %v426
    %v449 = vrot.slane %v448, 4
    %v450 = vadd.f32 %v448, %v449
    %v451 = vrot.slane %v450, 2
    %v452 = vadd.f32 %v450, %v451
    %v453 = vrot.slane %v452, 1
    %v454 = vadd.f32 %v452, %v453
    %456 = vset.pattern.permute.xlu0 0
    %457 = vperm.xlu0 %456, %v39
    %v458 = vpop.permute.xlu0 %457
    %461 = vset.pattern.permute.xlu0 0
    %462 = vperm.xlu0 %461, %v40
    %v463 = vpop.permute.xlu0 %462
    %466 = vset.pattern.permute.xlu0 0
    %467 = vperm.xlu0 %466, %v41
    %v468 = vpop.permute.xlu0 %467
    %471 = vset.pattern.permute.xlu0 0
    %472 = vperm.xlu0 %471, %v42
    %v473 = vpop.permute.xlu0 %472
    %v475 = vadd.f32 %v433, %v458
    %v476 = vadd.f32 %v440, %v458
    %v477 = vadd.f32 %v447, %v458
    %v478 = vadd.f32 %v454, %v458
    %v479 = vadd.f32 %v433, %v463
    %v480 = vadd.f32 %v440, %v463
    %v481 = vadd.f32 %v447, %v463
    %v482 = vadd.f32 %v454, %v463
    %v483 = vadd.f32 %v433, %v468
    %v484 = vadd.f32 %v440, %v468
    %v485 = vadd.f32 %v447, %v468
    %v486 = vadd.f32 %v454, %v468
    %v487 = vadd.f32 %v433, %v473
    %v488 = vadd.f32 %v440, %v473
    %v489 = vadd.f32 %v447, %v473
    %v490 = vadd.f32 %v454, %v473
    %v491 = vmul.f32 %v308, 2.0
    %v492 = vmul.f32 %v310, 2.0
    %v493 = vmul.f32 %v397, 2.0
    %v494 = vmul.f32 %v399, 2.0
    %v495 = vmul.f32 %v314, 2.0
    %v496 = vmul.f32 %v316, 2.0
    %v497 = vmul.f32 %v403, 2.0
    %v498 = vmul.f32 %v405, 2.0
    %v499 = vmul.f32 %v320, 2.0
    %v500 = vmul.f32 %v322, 2.0
    %v501 = vmul.f32 %v409, 2.0
    %v502 = vmul.f32 %v411, 2.0
    %v503 = vmul.f32 %v326, 2.0
    %v504 = vmul.f32 %v328, 2.0
    %v505 = vmul.f32 %v415, 2.0
    %v506 = vmul.f32 %v417, 2.0
    %v507 = vsub.f32 %v475, %v491
    %v508 = vsub.f32 %v476, %v492
    %v509 = vsub.f32 %v477, %v493
    %v510 = vsub.f32 %v478, %v494
    %v511 = vsub.f32 %v479, %v495
    %v512 = vsub.f32 %v480, %v496
    %v513 = vsub.f32 %v481, %v497
    %v514 = vsub.f32 %v482, %v498
    %v515 = vsub.f32 %v483, %v499
    %v516 = vsub.f32 %v484, %v500
    %v517 = vsub.f32 %v485, %v501
    %v518 = vsub.f32 %v486, %v502
    %v519 = vsub.f32 %v487, %v503
    %v520 = vsub.f32 %v488, %v504
    %v521 = vsub.f32 %v489, %v505
    %v522 = vsub.f32 %v490, %v506
    %v523 = vmin.f32 %v507, %v511
    %v524 = vmin.f32 %v523, %v515
    %v525 = vmin.f32 %v524, %v519
    %v526 = vrot.slane %v525, 4
    %v527 = vmin.f32 %v525, %v526
    %v528 = vrot.slane %v527, 2
    %v529 = vmin.f32 %v527, %v528
    %v530 = vrot.slane %v529, 1
    %v531 = vmin.f32 %v529, %v530
    %v532 = vmin.f32 %v508, %v512
    %v533 = vmin.f32 %v532, %v516
    %v534 = vmin.f32 %v533, %v520
    %v535 = vrot.slane %v534, 4
    %v536 = vmin.f32 %v534, %v535
    %v537 = vrot.slane %v536, 2
    %v538 = vmin.f32 %v536, %v537
    %v539 = vrot.slane %v538, 1
    %v540 = vmin.f32 %v538, %v539
    %v541 = vmin.f32 %v509, %v513
    %v542 = vmin.f32 %v541, %v517
    %v543 = vmin.f32 %v542, %v521
    %v544 = vrot.slane %v543, 4
    %v545 = vmin.f32 %v543, %v544
    %v546 = vrot.slane %v545, 2
    %v547 = vmin.f32 %v545, %v546
    %v548 = vrot.slane %v547, 1
    %v549 = vmin.f32 %v547, %v548
    %v550 = vmin.f32 %v510, %v514
    %v551 = vmin.f32 %v550, %v518
    %v552 = vmin.f32 %v551, %v522
    %v553 = vrot.slane %v552, 4
    %v554 = vmin.f32 %v552, %v553
    %v555 = vrot.slane %v554, 2
    %v556 = vmin.f32 %v554, %v555
    %v557 = vrot.slane %v556, 1
    %v558 = vmin.f32 %v556, %v557
    %v559 = vlaneseq
    %v560 = vshrl.u32 %v559, 7
    %v561 = vadd.s32 %v560, 8
    %v562 = vadd.s32 %v560, 16
    %v563 = vadd.s32 %v560, 24
    %vm564 = vcmp.eq.f32.partialorder %v507, %v531
    %vm565 = vcmp.eq.f32.partialorder %v508, %v540
    %vm566 = vcmp.eq.f32.partialorder %v509, %v549
    %vm567 = vcmp.eq.f32.partialorder %v510, %v558
    %vm568 = vcmp.eq.f32.partialorder %v511, %v531
    %vm569 = vcmp.eq.f32.partialorder %v512, %v540
    %vm570 = vcmp.eq.f32.partialorder %v513, %v549
    %vm571 = vcmp.eq.f32.partialorder %v514, %v558
    %vm572 = vcmp.eq.f32.partialorder %v515, %v531
    %vm573 = vcmp.eq.f32.partialorder %v516, %v540
    %vm574 = vcmp.eq.f32.partialorder %v517, %v549
    %vm575 = vcmp.eq.f32.partialorder %v518, %v558
    %vm576 = vcmp.eq.f32.partialorder %v519, %v531
    %vm577 = vcmp.eq.f32.partialorder %v520, %v540
    %vm578 = vcmp.eq.f32.partialorder %v521, %v549
    %vm579 = vcmp.eq.f32.partialorder %v522, %v558
    %v580 = vsel %vm564, %v560, 32
    %v581 = vsel %vm565, %v560, 32
    %v582 = vsel %vm566, %v560, 32
    %v583 = vsel %vm567, %v560, 32
    %v584 = vsel %vm568, %v561, 32
    %v585 = vsel %vm569, %v561, 32
    %v586 = vsel %vm570, %v561, 32
    %v587 = vsel %vm571, %v561, 32
    %v588 = vsel %vm572, %v562, 32
    %v589 = vsel %vm573, %v562, 32
    %v590 = vsel %vm574, %v562, 32
    %v591 = vsel %vm575, %v562, 32
    %v592 = vsel %vm576, %v563, 32
    %v593 = vsel %vm577, %v563, 32
    %v594 = vsel %vm578, %v563, 32
    %v595 = vsel %vm579, %v563, 32
    %vm596 = vcmp.lt.s32.totalorder %v580, %v584
    %v597 = vsel %vm596, %v580, %v584
    %vm598 = vcmp.lt.s32.totalorder %v597, %v588
    %v599 = vsel %vm598, %v597, %v588
    %vm600 = vcmp.lt.s32.totalorder %v599, %v592
    %v601 = vsel %vm600, %v599, %v592
    %v602 = vrot.slane %v601, 4
    %vm603 = vcmp.lt.s32.totalorder %v601, %v602
    %v604 = vsel %vm603, %v601, %v602
    %v605 = vrot.slane %v604, 2
    %vm606 = vcmp.lt.s32.totalorder %v604, %v605
    %v607 = vsel %vm606, %v604, %v605
    %v608 = vrot.slane %v607, 1
    %vm609 = vcmp.lt.s32.totalorder %v607, %v608
    %v610 = vsel %vm609, %v607, %v608
    %vm611 = vcmp.lt.s32.totalorder %v581, %v585
    %v612 = vsel %vm611, %v581, %v585
    %vm613 = vcmp.lt.s32.totalorder %v612, %v589
    %v614 = vsel %vm613, %v612, %v589
    %vm615 = vcmp.lt.s32.totalorder %v614, %v593
    %v616 = vsel %vm615, %v614, %v593
    %v617 = vrot.slane %v616, 4
    %vm618 = vcmp.lt.s32.totalorder %v616, %v617
    %v619 = vsel %vm618, %v616, %v617
    %v620 = vrot.slane %v619, 2
    %vm621 = vcmp.lt.s32.totalorder %v619, %v620
    %v622 = vsel %vm621, %v619, %v620
    %v623 = vrot.slane %v622, 1
    %vm624 = vcmp.lt.s32.totalorder %v622, %v623
    %v625 = vsel %vm624, %v622, %v623
    %vm626 = vcmp.lt.s32.totalorder %v582, %v586
    %v627 = vsel %vm626, %v582, %v586
    %vm628 = vcmp.lt.s32.totalorder %v627, %v590
    %v629 = vsel %vm628, %v627, %v590
    %vm630 = vcmp.lt.s32.totalorder %v629, %v594
    %v631 = vsel %vm630, %v629, %v594
    %v632 = vrot.slane %v631, 4
    %vm633 = vcmp.lt.s32.totalorder %v631, %v632
    %v634 = vsel %vm633, %v631, %v632
    %v635 = vrot.slane %v634, 2
    %vm636 = vcmp.lt.s32.totalorder %v634, %v635
    %v637 = vsel %vm636, %v634, %v635
    %v638 = vrot.slane %v637, 1
    %vm639 = vcmp.lt.s32.totalorder %v637, %v638
    %v640 = vsel %vm639, %v637, %v638
    %vm641 = vcmp.lt.s32.totalorder %v583, %v587
    %v642 = vsel %vm641, %v583, %v587
    %vm643 = vcmp.lt.s32.totalorder %v642, %v591
    %v644 = vsel %vm643, %v642, %v591
    %vm645 = vcmp.lt.s32.totalorder %v644, %v595
    %v646 = vsel %vm645, %v644, %v595
    %v647 = vrot.slane %v646, 4
    %vm648 = vcmp.lt.s32.totalorder %v646, %v647
    %v649 = vsel %vm648, %v646, %v647
    %v650 = vrot.slane %v649, 2
    %vm651 = vcmp.lt.s32.totalorder %v649, %v650
    %v652 = vsel %vm651, %v649, %v650
    %v653 = vrot.slane %v652, 1
    %vm654 = vcmp.lt.s32.totalorder %v652, %v653
    %v655 = vsel %vm654, %v652, %v653
    %vm656 = vcmp.eq.s32.totalorder %v560, %v610
    %vm657 = vcmp.eq.s32.totalorder %v560, %v625
    %vm658 = vcmp.eq.s32.totalorder %v560, %v640
    %vm659 = vcmp.eq.s32.totalorder %v560, %v655
    %vm660 = vcmp.eq.s32.totalorder %v561, %v610
    %vm661 = vcmp.eq.s32.totalorder %v561, %v625
    %vm662 = vcmp.eq.s32.totalorder %v561, %v640
    %vm663 = vcmp.eq.s32.totalorder %v561, %v655
    %vm664 = vcmp.eq.s32.totalorder %v562, %v610
    %vm665 = vcmp.eq.s32.totalorder %v562, %v625
    %vm666 = vcmp.eq.s32.totalorder %v562, %v640
    %vm667 = vcmp.eq.s32.totalorder %v562, %v655
    %vm668 = vcmp.eq.s32.totalorder %v563, %v610
    %vm669 = vcmp.eq.s32.totalorder %v563, %v625
    %vm670 = vcmp.eq.s32.totalorder %v563, %v640
    %vm671 = vcmp.eq.s32.totalorder %v563, %v655
    %v672 = vsel %vm656, 1, 0
    %v673 = vsel %vm657, 1, 0
    %v674 = vsel %vm658, 1, 0
    %v675 = vsel %vm659, 1, 0
    %v676 = vsel %vm660, 1, 0
    %v677 = vsel %vm661, 1, 0
    %v678 = vsel %vm662, 1, 0
    %v679 = vsel %vm663, 1, 0
    %v680 = vsel %vm664, 1, 0
    %v681 = vsel %vm665, 1, 0
    %v682 = vsel %vm666, 1, 0
    %v683 = vsel %vm667, 1, 0
    %v684 = vsel %vm668, 1, 0
    %v685 = vsel %vm669, 1, 0
    %v686 = vsel %vm670, 1, 0
    %v687 = vsel %vm671, 1, 0
    %v688 = vcvt.s32.f32 %v672
    %v689 = vcvt.s32.f32 %v673
    %v690 = vcvt.s32.f32 %v674
    %v691 = vcvt.s32.f32 %v675
    %v692 = vcvt.s32.f32 %v676
    %v693 = vcvt.s32.f32 %v677
    %v694 = vcvt.s32.f32 %v678
    %v695 = vcvt.s32.f32 %v679
    %v696 = vcvt.s32.f32 %v680
    %v697 = vcvt.s32.f32 %v681
    %v698 = vcvt.s32.f32 %v682
    %v699 = vcvt.s32.f32 %v683
    %v700 = vcvt.s32.f32 %v684
    %v701 = vcvt.s32.f32 %v685
    %v702 = vcvt.s32.f32 %v686
    %v703 = vcvt.s32.f32 %v687
    %vm704 = vcmask 261120
    %v706 = vsel %vm704, %v43, 0
    %v709 = vsel %vm704, %v44, 0
    %711 = vmatprep.subr.mxu0 0.0
    %712 = vmatpush1.msra.mxu0 0.0
    %713 = vmatprep.subr.mxu0 0.0
    %714 = vmatpush1.msra.mxu0 0.0
    %715 = vmatprep.subr.mxu0 0.0
    %716 = vmatpush1.msra.mxu0 0.0
    %717 = vmatprep.subr.mxu0 0.0
    %718 = vmatpush1.msra.mxu0 0.0
    %719 = vmatprep.subr.mxu0 0.0
    %720 = vmatpush1.msra.mxu0 0.0
    %721 = vmatprep.subr.mxu0 0.0
    %722 = vmatpush1.msra.mxu0 0.0
    %723 = vmatprep.subr.mxu0 0.0
    %724 = vmatpush1.msra.mxu0 0.0
    %725 = vmatprep.subr.mxu0 0.0
    %726 = vmatpush1.msra.mxu0 0.0
    %727 = vmatprep.subr.mxu0 0.0
    %728 = vmatpush1.msra.mxu0 0.0
    %729 = vmatprep.subr.mxu0 0.0
    %730 = vmatpush1.msra.mxu0 0.0
    %731 = vmatprep.subr.mxu0 0.0
    %732 = vmatpush1.msra.mxu0 0.0
    %733 = vmatprep.subr.mxu0 0.0
    %734 = vmatpush1.msra.mxu0 0.0
    %735 = vmatprep.subr.mxu0 %v701
    %736 = vmatpush1.msra.mxu0 %v700
    %737 = vmatprep.subr.mxu0 %v697
    %738 = vmatpush1.msra.mxu0 %v696
    %739 = vmatprep.subr.mxu0 %v693
    %740 = vmatpush1.msra.mxu0 %v692
    %741 = vmatprep.subr.mxu0 %v689
    %742 = vmatpush1.msra.mxu0 %v688
    %743 = vmatprep.subr.mxu0 0.0
    %744 = vmatpush2.msra.mxu0 0.0
    %745 = vmatprep.subr.mxu0 0.0
    %746 = vmatpush2.msra.mxu0 0.0
    %747 = vmatprep.subr.mxu0 0.0
    %748 = vmatpush2.msra.mxu0 0.0
    %749 = vmatprep.subr.mxu0 0.0
    %750 = vmatpush2.msra.mxu0 0.0
    %751 = vmatprep.subr.mxu0 0.0
    %752 = vmatpush2.msra.mxu0 0.0
    %753 = vmatprep.subr.mxu0 0.0
    %754 = vmatpush2.msra.mxu0 0.0
    %755 = vmatprep.subr.mxu0 0.0
    %756 = vmatpush2.msra.mxu0 0.0
    %757 = vmatprep.subr.mxu0 0.0
    %758 = vmatpush2.msra.mxu0 0.0
    %759 = vmatprep.subr.mxu0 0.0
    %760 = vmatpush2.msra.mxu0 0.0
    %761 = vmatprep.subr.mxu0 0.0
    %762 = vmatpush2.msra.mxu0 0.0
    %763 = vmatprep.subr.mxu0 0.0
    %764 = vmatpush2.msra.mxu0 0.0
    %765 = vmatprep.subr.mxu0 0.0
    %766 = vmatpush2.msra.mxu0 0.0
    %767 = vmatprep.subr.mxu0 0.0
    %768 = vmatpush2.msra.mxu0 0.0
    %769 = vmatprep.subr.mxu0 0.0
    %770 = vmatpush2.msra.mxu0 0.0
    %771 = vmatprep.subr.mxu0 0.0
    %772 = vmatpush2.msra.mxu0 0.0
    %773 = vmatprep.subr.mxu0 0.0
    %774 = vmatpush2.msra.mxu0 0.0
    %775 = vmatprep.mubr.f32.mxu0 0.0
    %776 = vmatmul.mubr.f32.gmra.mxu0 %v706
    %v777 = vpop.f32.mrf.mxu0
    %v778 = vadd.f32 0.0, %v777
    %v779 = vpop.f32.mrf.mxu0
    %v780 = vadd.f32 0.0, %v779
    %781 = vmatprep.mubr.f32.mxu0 0.0
    %782 = vmatmul.mubr.f32.gmra.mxu0 %v709
    %v783 = vpop.f32.mrf.mxu0
    %v784 = vadd.f32 0.0, %v783
    %v785 = vpop.f32.mrf.mxu0
    %v786 = vadd.f32 0.0, %v785
    %787 = vdwg.mxu0
    %788 = vmatprep.subr.mxu0 0.0
    %789 = vmatpush1.msra.mxu0 0.0
    %790 = vmatprep.subr.mxu0 0.0
    %791 = vmatpush1.msra.mxu0 0.0
    %792 = vmatprep.subr.mxu0 0.0
    %793 = vmatpush1.msra.mxu0 0.0
    %794 = vmatprep.subr.mxu0 0.0
    %795 = vmatpush1.msra.mxu0 0.0
    %796 = vmatprep.subr.mxu0 0.0
    %797 = vmatpush1.msra.mxu0 0.0
    %798 = vmatprep.subr.mxu0 0.0
    %799 = vmatpush1.msra.mxu0 0.0
    %800 = vmatprep.subr.mxu0 0.0
    %801 = vmatpush1.msra.mxu0 0.0
    %802 = vmatprep.subr.mxu0 0.0
    %803 = vmatpush1.msra.mxu0 0.0
    %804 = vmatprep.subr.mxu0 0.0
    %805 = vmatpush1.msra.mxu0 0.0
    %806 = vmatprep.subr.mxu0 0.0
    %807 = vmatpush1.msra.mxu0 0.0
    %808 = vmatprep.subr.mxu0 0.0
    %809 = vmatpush1.msra.mxu0 0.0
    %810 = vmatprep.subr.mxu0 0.0
    %811 = vmatpush1.msra.mxu0 0.0
    %812 = vmatprep.subr.mxu0 %v703
    %813 = vmatpush1.msra.mxu0 %v702
    %814 = vmatprep.subr.mxu0 %v699
    %815 = vmatpush1.msra.mxu0 %v698
    %816 = vmatprep.subr.mxu0 %v695
    %817 = vmatpush1.msra.mxu0 %v694
    %818 = vmatprep.subr.mxu0 %v691
    %819 = vmatpush1.msra.mxu0 %v690
    %820 = vmatprep.subr.mxu0 0.0
    %821 = vmatpush2.msra.mxu0 0.0
    %822 = vmatprep.subr.mxu0 0.0
    %823 = vmatpush2.msra.mxu0 0.0
    %824 = vmatprep.subr.mxu0 0.0
    %825 = vmatpush2.msra.mxu0 0.0
    %826 = vmatprep.subr.mxu0 0.0
    %827 = vmatpush2.msra.mxu0 0.0
    %828 = vmatprep.subr.mxu0 0.0
    %829 = vmatpush2.msra.mxu0 0.0
    %830 = vmatprep.subr.mxu0 0.0
    %831 = vmatpush2.msra.mxu0 0.0
    %832 = vmatprep.subr.mxu0 0.0
    %833 = vmatpush2.msra.mxu0 0.0
    %834 = vmatprep.subr.mxu0 0.0
    %835 = vmatpush2.msra.mxu0 0.0
    %836 = vmatprep.subr.mxu0 0.0
    %837 = vmatpush2.msra.mxu0 0.0
    %838 = vmatprep.subr.mxu0 0.0
    %839 = vmatpush2.msra.mxu0 0.0
    %840 = vmatprep.subr.mxu0 0.0
    %841 = vmatpush2.msra.mxu0 0.0
    %842 = vmatprep.subr.mxu0 0.0
    %843 = vmatpush2.msra.mxu0 0.0
    %844 = vmatprep.subr.mxu0 0.0
    %845 = vmatpush2.msra.mxu0 0.0
    %846 = vmatprep.subr.mxu0 0.0
    %847 = vmatpush2.msra.mxu0 0.0
    %848 = vmatprep.subr.mxu0 0.0
    %849 = vmatpush2.msra.mxu0 0.0
    %850 = vmatprep.subr.mxu0 0.0
    %851 = vmatpush2.msra.mxu0 0.0
    %852 = vmatprep.mubr.f32.mxu0 0.0
    %853 = vmatmul.mubr.f32.gmra.mxu0 %v706
    %v854 = vpop.f32.mrf.mxu0
    %v855 = vadd.f32 0.0, %v854
    %v856 = vpop.f32.mrf.mxu0
    %v857 = vadd.f32 0.0, %v856
    %858 = vmatprep.mubr.f32.mxu0 0.0
    %859 = vmatmul.mubr.f32.gmra.mxu0 %v709
    %v860 = vpop.f32.mrf.mxu0
    %v861 = vadd.f32 0.0, %v860
    %v862 = vpop.f32.mrf.mxu0
    %v863 = vadd.f32 0.0, %v862
    %864 = vdwg.mxu0
    %865 = vst [vmem:[#allocation2] sm:$0xff] %v778
    %866 = vst [vmem:[#allocation2 + $0x8] sm:$0xff] %v780
    %867 = vst [vmem:[#allocation2 + $0x10] sm:$0xff] %v855
    %868 = vst [vmem:[#allocation2 + $0x18] sm:$0xff] %v857
    %869 = vst [vmem:[#allocation2 + $0x20] sm:$0xff] %v784
    %870 = vst [vmem:[#allocation2 + $0x28] sm:$0xff] %v786
    %871 = vst [vmem:[#allocation2 + $0x30] sm:$0xff] %v861
    %872 = vst [vmem:[#allocation2 + $0x38] sm:$0xff] %v863
    %v873 = vcombine.low %v610, %v625
    %v874 = vcombine.low %v640, %v655
    %v876 = vunpack.c.l.s4 1966171168
    %v877 = vunpack.c.0.s8 %v876
    %v878 = vlaneseq
    %v879 = vshrl.u32 %v878, 7
    %v880 = vsub.s32 %v877, %v879
    %v881 = vrot.slane %v873, %v880
    %v883 = vunpack.c.l.s4 1966171168
    %v884 = vunpack.c.0.s8 %v883
    %v885 = vlaneseq
    %v886 = vshrl.u32 %v885, 7
    %v887 = vsub.s32 %v884, %v886
    %v888 = vrot.slane %v874, %v887
    %v889 = vcombine.low %v881, %v888
    %v891 = vunpack.c.l.s4 1966171168
    %v892 = vunpack.c.0.s8 %v891
    %v893 = vlaneseq
    %v894 = vshrl.u32 %v893, 7
    %v895 = vsub.s32 %v892, %v894
    %v896 = vrot.slane %v889, %v895
    %v897 = vlaneseq
    %vm898 = vcmp.ge.s32.totalorder %v897, 0
    %vm899 = vcmp.lt.s32.totalorder %v897, 512
    %vm900 = vmand %vm898, %vm899
    %901 = vst.msk [vmem:[#allocation4] sm:$0xf] %vm900, %v896
    %v902 = vadd.f32 %v688, %v689
    %v903 = vadd.f32 %v902, %v690
    %v904 = vadd.f32 %v903, %v691
    %905 = vadd.xlane.f32.xlu0 %v904
    %v906 = vpop.xlane.xlu0 %905
    %v907 = vadd.f32 %v692, %v693
    %v908 = vadd.f32 %v907, %v694
    %v909 = vadd.f32 %v908, %v695
    %910 = vadd.xlane.f32.xlu0 %v909
    %v911 = vpop.xlane.xlu0 %910
    %v912 = vadd.f32 %v696, %v697
    %v913 = vadd.f32 %v912, %v698
    %v914 = vadd.f32 %v913, %v699
    %915 = vadd.xlane.f32.xlu0 %v914
    %v916 = vpop.xlane.xlu0 %915
    %v917 = vadd.f32 %v700, %v701
    %v918 = vadd.f32 %v917, %v702
    %v919 = vadd.f32 %v918, %v703
    %920 = vadd.xlane.f32.xlu0 %v919
    %v921 = vpop.xlane.xlu0 %920
    %vm922 = vcmask 7168
    %923 = vst.msk [vmem:[%s8] sm:$0xff] %vm922, %v906
    %924 = vst.msk [vmem:[%s8 + $0x8] sm:$0xff] %vm922, %v911
    %925 = vst.msk [vmem:[%s8 + $0x10] sm:$0xff] %vm922, %v916
    %926 = vst.msk [vmem:[%s8 + $0x18] sm:$0xff] %vm922, %v921
    %v927 = vsub.f32 %v778, %v142
    %v928 = vsub.f32 %v780, %v144
    %v929 = vsub.f32 %v855, %v219
    %v930 = vsub.f32 %v857, %v221
    %v931 = vsub.f32 %v784, %v148
    %v932 = vsub.f32 %v786, %v150
    %v933 = vsub.f32 %v861, %v225
    %v934 = vsub.f32 %v863, %v227
    %v935 = vmul.f32 %v927, %v927
    %v936 = vmul.f32 %v928, %v928
    %v937 = vmul.f32 %v929, %v929
    %v938 = vmul.f32 %v930, %v930
    %v939 = vmul.f32 %v931, %v931
    %v940 = vmul.f32 %v932, %v932
    %v941 = vmul.f32 %v933, %v933
    %v942 = vmul.f32 %v934, %v934
    %v943 = vadd.f32 %v935, %v936
    %v944 = vadd.f32 %v943, %v937
    %v945 = vadd.f32 %v944, %v938
    %946 = vadd.xlane.f32.xlu0 %v945
    %v947 = vpop.xlane.xlu0 %946
    %v948 = vadd.f32 %v939, %v940
    %v949 = vadd.f32 %v948, %v941
    %v950 = vadd.f32 %v949, %v942
    %951 = vadd.xlane.f32.xlu0 %v950
    %v952 = vpop.xlane.xlu0 %951
    %v953 = vadd.f32 %v947, %v952
    %v954 = vrot.slane %v953, 4
    %v955 = vadd.f32 %v953, %v954
    %v956 = vrot.slane %v955, 2
    %v957 = vadd.f32 %v955, %v956
    %v958 = vrot.slane %v957, 1
    %v959 = vadd.f32 %v957, %v958
    %vm960 = vcmask 0
    %961 = vst.msk [vmem:[#allocation6] sm:$0x1] %vm960, %v959
    // Predicated region
    $region26: #{tpu_custom_call.1} parent=1 // pred_check
      _
    $region27: #{tpu_custom_call.1} parent=1 // pred_check_branch
      %963 = sbr.rel (0) target = $region29
    $region28: #{tpu_custom_call.1} parent=1 // pred_region
      %s965 = ssub.s32 1024, 1024
      %966 = vsyncadd [#allocation3], %s965
      %s967 = sshll.u32 [#allocation2], 4
      %s968 = int_to_ptr.vmem [resolvable:$true] %s967
      %973 = dma.vmem_to_hbm [thread:$0]  %s968, 1024, %s6, [#allocation3], 512, 512, 32
    $region29: #{tpu_custom_call.1} parent=1 // pred_fallthru
      _
    // Predicated region
    $region30: #{tpu_custom_call.1} parent=1 // pred_check
      _
    $region31: #{tpu_custom_call.1} parent=1 // pred_check_branch
      %975 = sbr.rel (0) target = $region33
    $region32: #{tpu_custom_call.1} parent=1 // pred_region
      %s977 = ssub.s32 64, 64
      %978 = vsyncadd [#allocation5], %s977
      %s980 = sshll.u32 [#allocation4], 4
      %s981 = int_to_ptr.vmem [resolvable:$true] %s980
      %983 = dma.vmem_to_hbm [thread:$0]  %s981, 64, %s7, [#allocation5]
    $region33: #{tpu_custom_call.1} parent=1 // pred_fallthru
      _
    // Predicated region
    $region34: #{tpu_custom_call.1} parent=1 // pred_check
      _
    $region35: #{tpu_custom_call.1} parent=1 // pred_check_branch
      %985 = sbr.rel (0) target = $region37
    $region36: #{tpu_custom_call.1} parent=1 // pred_region
      _
    $region37: #{tpu_custom_call.1} parent=1 // pred_fallthru
      _
    // Predicated region
    $region38: #{tpu_custom_call.1} parent=1 // pred_check
      _
    $region39: #{tpu_custom_call.1} parent=1 // pred_check_branch
      %987 = sbr.rel (0) target = $region41
    $region40: #{tpu_custom_call.1} parent=1 // pred_region
      %s989 = ssub.s32 16, 16
      %990 = vsyncadd [#allocation5], %s989
      %s992 = sshll.u32 [#allocation6], 4
      %s993 = int_to_ptr.vmem [resolvable:$true] %s992
      %995 = dma.vmem_to_hbm [thread:$0]  %s993, 16, %s9, [#allocation5]
    $region41: #{tpu_custom_call.1} parent=1 // pred_fallthru
      _
    // Predicated region
    $region42: #{tpu_custom_call.1} parent=1 // pred_check
      _
    $region43: #{tpu_custom_call.1} parent=1 // pred_check_branch
      %997 = sbr.rel (0) target = $region45
    $region44: #{tpu_custom_call.1} parent=1 // pred_region
      %998 = dma.done [#allocation3], 1024
    $region45: #{tpu_custom_call.1} parent=1 // pred_fallthru
      _
    // Predicated region
    $region46: #{tpu_custom_call.1} parent=1 // pred_check
      _
    $region47: #{tpu_custom_call.1} parent=1 // pred_check_branch
      %1000 = sbr.rel (0) target = $region49
    $region48: #{tpu_custom_call.1} parent=1 // pred_region
      %1001 = dma.done [#allocation5], 64
    $region49: #{tpu_custom_call.1} parent=1 // pred_fallthru
      _
    // Predicated region
    $region50: #{tpu_custom_call.1} parent=1 // pred_check
      _
    $region51: #{tpu_custom_call.1} parent=1 // pred_check_branch
      %1003 = sbr.rel (0) target = $region53
    $region52: #{tpu_custom_call.1} parent=1 // pred_region
      _
    $region53: #{tpu_custom_call.1} parent=1 // pred_fallthru
      _
    // Predicated region
    $region54: #{tpu_custom_call.1} parent=1 // pred_check
      _
    $region55: #{tpu_custom_call.1} parent=1 // pred_check_branch
      %1005 = sbr.rel (0) target = $region57
    $region56: #{tpu_custom_call.1} parent=1 // pred_region
      %1006 = dma.done [#allocation5], 16
    $region57: #{tpu_custom_call.1} parent=1 // pred_fallthru
      _
    %1007 = vsyncpa [#allocation3], 1
    %1008 = vsyncpa [#allocation5], 1

</llo_original>
